<compile_context>
chip_gen: v7x
topology: tpu7x:2x2x1
jax: 0.10.0
libtpu: 0.0.40
codegen_flags: <defaults>
</compile_context>

<pallas_src>
import jax
import jax.numpy as jnp
from jax.experimental import pallas as pl
from jax.experimental.pallas import tpu as pltpu


# ----------------------------- Pallas kernel -------------------------------

def fused_im2col_gap_head_kernel(x_ref, wc_ref, bc_ref, wh_ref, bh_ref, out_ref):
    """One grid step = Bb images.

    x_ref  : (Bb, HW, Kp) bf16  im2col patches (lane-dense, Kp = 128)
    wc_ref : (Kp, CP)     bf16  conv weights (tap-major rows, zero padded)
    bc_ref : (1, CP)      f32   conv bias (lane padded)
    wh_ref : (CP, HP)     f32   fused [box | cls] head weights (padded)
    bh_ref : (1, HP)      f32   fused head bias (padded)
    out_ref: (Bb, 1, HP)  f32   sigmoid(head) per image
    """
    Bb, HW, Kp = x_ref.shape
    CP = wc_ref.shape[1]

    # conv3x3 as ONE im2col GEMM: (Bb*HW, Kp) x (Kp, CP), f32 accumulate.
    lhs = x_ref[...].reshape(Bb * HW, Kp)
    acc = jnp.dot(lhs, wc_ref[...], preferred_element_type=jnp.float32)

    # bias + ReLU (single broadcast, no loop).
    act = jnp.maximum(acc + bc_ref[...], 0.0)                       # (Bb*HW, CP)

    # global average pool per image -> (Bb, CP); feature map never hits HBM.
    feat = jnp.sum(act.reshape(Bb, HW, CP), axis=1) * (1.0 / HW)

    # fused detection heads: lane-dense matmul + bias, sigmoid on the EUP.
    head = jnp.dot(feat, wh_ref[...],
                   preferred_element_type=jnp.float32) + bh_ref[...]  # (Bb, HP)
    out_ref[...] = jax.nn.sigmoid(head)[:, None, :]


# ----------------------------- Pallas wrapper -------------------------------

def _round_up(x, m):
    return ((x + m - 1) // m) * m


def _choose_batch_block(B):
    """Largest divisor of B that still leaves >= 2 grid steps (v7x: 2 TCs)."""
    if B <= 1:
        return 1
    for bb in range(B // 2, 0, -1):
        if B % bb == 0:
            return bb
    return 1


def fused_im2col_gap_heads(x_col, wc, bc, wh, bh):
    """x_col: (B, HW, Kp) bf16  ->  (B, HP) f32 fused head outputs."""
    B, HW, Kp = x_col.shape
    CP = wc.shape[1]
    HP = wh.shape[1]
    bb = _choose_batch_block(B)
    grid = (B // bb,)

    out = pl.pallas_call(
        fused_im2col_gap_head_kernel,
        out_shape=jax.ShapeDtypeStruct((B, 1, HP), jnp.float32),
        grid=grid,
        in_specs=[
            pl.BlockSpec((bb, HW, Kp), lambda i: (i, 0, 0)),
            pl.BlockSpec((Kp, CP), lambda i: (0, 0)),
            pl.BlockSpec((1, CP), lambda i: (0, 0)),
            pl.BlockSpec((CP, HP), lambda i: (0, 0)),
            pl.BlockSpec((1, HP), lambda i: (0, 0)),
        ],
        out_specs=pl.BlockSpec((bb, 1, HP), lambda i: (i, 0, 0)),
        compiler_params=pltpu.CompilerParams(
            dimension_semantics=("parallel",)),
    )(x_col, wc, bc, wh, bh)
    return out.reshape(B, HP)


# ------------------------------- "BaseModel" --------------------------------

class SimpleDetectionModel:
    """Synthetic detection model standing in for BaseModel.

    images (B, C, H, W)  ->  conv3x3 ("same", zero pad) + ReLU
                         ->  global-avg-pool
                         ->  box head (A*4) + class head (A*K), sigmoid
                         ->  per-image dicts with boxes / scores / labels
    The whole hot path runs in one fused Pallas kernel.
    """

    def __init__(self, key, c_in=4, c_hid=32, num_anchors=4, num_classes=8):
        self.c_in = c_in
        self.c_hid = c_hid
        self.num_anchors = num_anchors
        self.num_classes = num_classes
        k1, k2, k3, k4, k5 = jax.random.split(key, 5)
        # conv weight in im2col layout (9*C_in, C_hid),
        # row index = (dy*3 + dx) * C_in + cin
        self.w_conv = 0.1 * jax.random.normal(k1, (9 * c_in, c_hid), jnp.float32)
        self.b_conv = jnp.zeros((1, c_hid), jnp.float32)
        self.w_box = 0.1 * jax.random.normal(k2, (c_hid, num_anchors * 4), jnp.float32)
        self.b_box = 0.01 * jax.random.normal(k3, (1, num_anchors * 4), jnp.float32)
        self.w_cls = 0.1 * jax.random.normal(k4, (c_hid, num_anchors * num_classes), jnp.float32)
        self.b_cls = 0.01 * jax.random.normal(k5, (1, num_anchors * num_classes), jnp.float32)

        # ---- precompute kernel-friendly padded / fused operands (once) ----
        self.kp = max(128, _round_up(9 * c_in, 128))        # lane-dense im2col K
        self.cp = max(128, _round_up(c_hid, 128))            # lane-dense hidden
        head_dim = num_anchors * 4 + num_anchors * num_classes
        self.head_dim = head_dim
        self.hp = max(128, _round_up(head_dim, 128))          # lane-dense head

        # NOTE: inputs / conv weights run in bf16 on the MXU with f32
        # accumulation (not bit-exact vs an f32 PyTorch conv; tolerance-tested
        # in __main__).
        self.wc_pad = jnp.pad(
            self.w_conv,
            ((0, self.kp - 9 * c_in), (0, self.cp - c_hid))).astype(jnp.bfloat16)
        self.bc_pad = jnp.pad(self.b_conv, ((0, 0), (0, self.cp - c_hid)))

        wh = jnp.concatenate([self.w_box, self.w_cls], axis=1)      # (c_hid, head_dim)
        self.wh_pad = jnp.pad(wh, ((0, self.cp - c_hid), (0, self.hp - head_dim)))
        bh = jnp.concatenate([self.b_box, self.b_cls], axis=1)      # (1, head_dim)
        self.bh_pad = jnp.pad(bh, ((0, 0), (0, self.hp - head_dim)))

    # ---- host-side glue: lane-dense im2col repack (no feature map in HBM) ----
    def _im2col(self, images):
        B, C, H, W = images.shape
        x = jnp.transpose(images.astype(jnp.float32), (0, 2, 3, 1))   # NHWC
        xp = jnp.pad(x, ((0, 0), (1, 1), (1, 1), (0, 0)))             # "same" pad
        patches = [xp[:, dy:dy + H, dx:dx + W, :]
                   for dy in range(3) for dx in range(3)]
        x_col = jnp.concatenate(patches, axis=-1).reshape(B, H * W, 9 * C)
        x_col = jnp.pad(x_col, ((0, 0), (0, 0), (0, self.kp - 9 * C)))
        return x_col.astype(jnp.bfloat16)                              # (B, HW, Kp)

    def _heads(self, images):
        """(B, head_dim) sigmoid(head) via the fused Pallas kernel."""
        x_col = self._im2col(images)
        head = fused_im2col_gap_heads(x_col, self.wc_pad, self.bc_pad,
                                      self.wh_pad, self.bh_pad)        # (B, HP)
        return head[:, :self.head_dim]

    def _reference_heads(self, images):
        """Pure-JAX f32 reference for tolerance checking."""
        B, C, H, W = images.shape
        x = jnp.transpose(images.astype(jnp.float32), (0, 2, 3, 1))
        xp = jnp.pad(x, ((0, 0), (1, 1), (1, 1), (0, 0)))
        cols = jnp.concatenate([xp[:, dy:dy + H, dx:dx + W, :]
                                for dy in range(3) for dx in range(3)],
                               axis=-1).reshape(B, H * W, 9 * C)
        act = jnp.maximum(cols @ self.w_conv + self.b_conv, 0.0)
        feat = jnp.mean(act, axis=1)                                   # GAP
        head = jnp.concatenate([feat @ self.w_box + self.b_box,
                                feat @ self.w_cls + self.b_cls], axis=-1)
        return jax.nn.sigmoid(head)

    def __call__(self, batch):
        images, _metadata = batch
        B, C, H, W = images.shape
        assert C == self.c_in

        head = self._heads(images)                                     # (B, head_dim)

        A, K = self.num_anchors, self.num_classes
        boxes_n = head[:, :A * 4].reshape(B, A, 4)
        cls_prob = head[:, A * 4:A * 4 + A * K].reshape(B, A, K)

        # post-processing glue: assemble [x1, y1, x2, y2], scores, labels
        x1 = jnp.minimum(boxes_n[..., 0], boxes_n[..., 2]) * W
        x2 = jnp.maximum(boxes_n[..., 0], boxes_n[..., 2]) * W
        y1 = jnp.minimum(boxes_n[..., 1], boxes_n[..., 3]) * H
        y2 = jnp.maximum(boxes_n[..., 1], boxes_n[..., 3]) * H
        boxes = jnp.stack([x1, y1, x2, y2], axis=-1)                   # (B, A, 4)

        scores = jnp.max(cls_prob, axis=-1)                            # (B, A)
        labels = jnp.argmax(cls_prob, axis=-1).astype(jnp.int32)       # (B, A)

        results = []
        for i in range(B):
            results.append({
                "boxes": boxes[i],    # (A, 4)  [x1, y1, x2, y2]
                "scores": scores[i],  # (A,)
                "labels": labels[i],  # (A,)
            })
        return results


# ------------------------------ LabelingModule ------------------------------

class LabelingModule:
    """JAX/Pallas port of the PyTorch LabelingModule wrapper."""

    def __init__(self, model, config=None):
        self.model = model
        self.config = config or {}

    def forward(self, batch):
        results = self.model(batch)
        return {"predictions": results, "metadata": batch}

    __call__ = forward


# ----------------------------------- main -----------------------------------

if __name__ == "__main__":
    key = jax.random.PRNGKey(0)
    k_img, k_model = jax.random.split(key)

    # small shapes consistent with the (B, C, H, W) contract
    images = jax.random.normal(k_img, (2, 4, 16, 16), jnp.float32)
    metadata = {"image_ids": [0, 1], "orig_size": (16, 16)}
    batch = (images, metadata)

    model = SimpleDetectionModel(k_model, c_in=4, c_hid=32,
                                 num_anchors=4, num_classes=8)
    module = LabelingModule(model, config={"score_threshold": 0.0})

    # correctness: fused Pallas path vs pure-JAX f32 reference (bf16 tolerance)
    got = jax.block_until_ready(model._heads(images))
    ref = jax.block_until_ready(model._reference_heads(images))
    if not jnp.allclose(got, ref, rtol=5e-2, atol=5e-2):
        raise AssertionError("Pallas fused head output mismatch vs reference")

    out = module(batch)
    for pred in out["predictions"]:
        jax.block_until_ready(pred["boxes"])
        jax.block_until_ready(pred["scores"])
        jax.block_until_ready(pred["labels"])

    print("KERNEL_OK")
</pallas_src>

<mosaic_0001>
module attributes {stable_mosaic.version = 11 : i64} {
  func.func @fused_im2col_gap_head_kernel(%arg0: i32, %arg1: memref<1x256x128xbf16, #tpu.memory_space<vmem>>, %arg2: memref<128x128xbf16, #tpu.memory_space<vmem>>, %arg3: memref<1x128xf32, #tpu.memory_space<vmem>>, %arg4: memref<128x128xf32, #tpu.memory_space<vmem>>, %arg5: memref<1x128xf32, #tpu.memory_space<vmem>>, %arg6: memref<1x1x128xf32, #tpu.memory_space<vmem>>) attributes {dimension_semantics = [#tpu.dimension_semantics<parallel>], iteration_bounds = array<i64: 2>, scalar_prefetch = 0 : i64, scratch_operands = 0 : i64, tpu.core_type = #tpu.core_type<tc>, window_params = [{transform_indices = @transform_0, window_bounds = array<i64: 1, 256, 128>}, {pipeline_mode = #tpu.pipeline_mode<synchronous>, transform_indices = @transform_1, window_bounds = array<i64: 128, 128>}, {pipeline_mode = #tpu.pipeline_mode<synchronous>, transform_indices = @transform_2, window_bounds = array<i64: 1, 128>}, {pipeline_mode = #tpu.pipeline_mode<synchronous>, transform_indices = @transform_3, window_bounds = array<i64: 128, 128>}, {pipeline_mode = #tpu.pipeline_mode<synchronous>, transform_indices = @transform_4, window_bounds = array<i64: 1, 128>}, {transform_indices = @transform_5, window_bounds = array<i64: 1, 1, 128>}]} {
    %c0 = arith.constant 0 : index
    %c0_0 = arith.constant 0 : index
    %c0_1 = arith.constant 0 : index
    %0 = vector.load %arg1[%c0, %c0_0, %c0_1] : memref<1x256x128xbf16, #tpu.memory_space<vmem>>, vector<1x256x128xbf16>
    %1 = vector.shape_cast %0 : vector<1x256x128xbf16> to vector<256x128xbf16>
    %c0_2 = arith.constant 0 : index
    %c0_3 = arith.constant 0 : index
    %2 = vector.load %arg2[%c0_2, %c0_3] : memref<128x128xbf16, #tpu.memory_space<vmem>>, vector<128x128xbf16>
    %cst = arith.constant dense<0.000000e+00> : vector<256x128xf32>
    %3 = tpu.matmul %1, %2, %cst {dimension_numbers = #tpu.dot_dimension_numbers<[1], [0], [0], [1], [0, 0, 1, 1], [], []>} : vector<256x128xbf16>, vector<128x128xbf16>, vector<256x128xf32> -> vector<256x128xf32>
    %c0_4 = arith.constant 0 : index
    %c0_5 = arith.constant 0 : index
    %4 = vector.load %arg3[%c0_4, %c0_5] : memref<1x128xf32, #tpu.memory_space<vmem>>, vector<1x128xf32>
    %5 = vector.broadcast %4 : vector<1x128xf32> to vector<256x128xf32>
    %6 = arith.addf %3, %5 : vector<256x128xf32>
    %cst_6 = arith.constant 0.000000e+00 : f32
    %7 = vector.broadcast %cst_6 : f32 to vector<256x128xf32>
    %8 = arith.maximumf %6, %7 : vector<256x128xf32>
    %9 = vector.shape_cast %8 : vector<256x128xf32> to vector<1x256x128xf32>
    %cst_7 = arith.constant dense<0.000000e+00> : vector<1x128xf32>
    %10 = vector.multi_reduction <add>, %9, %cst_7 [1] : vector<1x256x128xf32> to vector<1x128xf32>
    %cst_8 = arith.constant 3.906250e-03 : f32
    %11 = vector.broadcast %cst_8 : f32 to vector<1x128xf32>
    %12 = arith.mulf %10, %11 : vector<1x128xf32>
    %c0_9 = arith.constant 0 : index
    %c0_10 = arith.constant 0 : index
    %13 = vector.load %arg4[%c0_9, %c0_10] : memref<128x128xf32, #tpu.memory_space<vmem>>, vector<128x128xf32>
    %cst_11 = arith.constant dense<0.000000e+00> : vector<1x128xf32>
    %14 = tpu.matmul %12, %13, %cst_11 {dimension_numbers = #tpu.dot_dimension_numbers<[1], [0], [0], [1], [0, 0, 1, 1], [], []>} : vector<1x128xf32>, vector<128x128xf32>, vector<1x128xf32> -> vector<1x128xf32>
    %c0_12 = arith.constant 0 : index
    %c0_13 = arith.constant 0 : index
    %15 = vector.load %arg5[%c0_12, %c0_13] : memref<1x128xf32, #tpu.memory_space<vmem>>, vector<1x128xf32>
    %16 = arith.addf %14, %15 : vector<1x128xf32>
    %17 = arith.negf %16 : vector<1x128xf32>
    %18 = math.exp %17 : vector<1x128xf32>
    %cst_14 = arith.constant 1.000000e+00 : f32
    %19 = vector.broadcast %cst_14 : f32 to vector<1x128xf32>
    %20 = arith.addf %19, %18 : vector<1x128xf32>
    %21 = arith.divf %19, %20 : vector<1x128xf32>
    %22 = vector.shape_cast %21 : vector<1x128xf32> to vector<1x1x128xf32>
    %c0_15 = arith.constant 0 : index
    %c0_16 = arith.constant 0 : index
    %c0_17 = arith.constant 0 : index
    %23 = vector.load %arg6[%c0_15, %c0_16, %c0_17] : memref<1x1x128xf32, #tpu.memory_space<vmem>>, vector<1x1x128xf32>
    tpu.vector_store %arg6[%c0_15, %c0_16, %c0_17], %22 {strides = array<i32>} : memref<1x1x128xf32, #tpu.memory_space<vmem>>, vector<1x1x128xf32>,
    return
  }
  func.func @transform_0(%arg0: i32) -> (i32, i32, i32) {
    %c0_i32 = arith.constant 0 : i32
    %c0_i32_0 = arith.constant 0 : i32
    %c0_i32_1 = arith.constant 0 : i32
    return %arg0, %c0_i32, %c0_i32_0 : i32, i32, i32
  }
  func.func @transform_1(%arg0: i32) -> (i32, i32) {
    %c0_i32 = arith.constant 0 : i32
    %c0_i32_0 = arith.constant 0 : i32
    %c0_i32_1 = arith.constant 0 : i32
    return %c0_i32, %c0_i32_0 : i32, i32
  }
  func.func @transform_2(%arg0: i32) -> (i32, i32) {
    %c0_i32 = arith.constant 0 : i32
    %c0_i32_0 = arith.constant 0 : i32
    %c0_i32_1 = arith.constant 0 : i32
    return %c0_i32, %c0_i32_0 : i32, i32
  }
  func.func @transform_3(%arg0: i32) -> (i32, i32) {
    %c0_i32 = arith.constant 0 : i32
    %c0_i32_0 = arith.constant 0 : i32
    %c0_i32_1 = arith.constant 0 : i32
    return %c0_i32, %c0_i32_0 : i32, i32
  }
  func.func @transform_4(%arg0: i32) -> (i32, i32) {
    %c0_i32 = arith.constant 0 : i32
    %c0_i32_0 = arith.constant 0 : i32
    %c0_i32_1 = arith.constant 0 : i32
    return %c0_i32, %c0_i32_0 : i32, i32
  }
  func.func @transform_5(%arg0: i32) -> (i32, i32, i32) {
    %c0_i32 = arith.constant 0 : i32
    %c0_i32_0 = arith.constant 0 : i32
    %c0_i32_1 = arith.constant 0 : i32
    return %arg0, %c0_i32, %c0_i32_0 : i32, i32, i32
  }
}

</mosaic_0001>

<llo_original>
// kernel: tpu_custom_call.1
$region0: #{tpu_custom_call.1}
  #allocation0 [shape = 'u32[]', space=smem, size = 0x4, offset = 0x4, fixed_abs, tag = 'smem constant byte address 0x4 - core index']
  #allocation1 [shape = 'u32[144,128]{1,0:T(1,128)}', space=vmem, size = 0x12000, scoped, tag = 'internal scratch']
  %s0 = inlined_call_operand.hbm [shape: bf16[2,256,128], index: 0, kind: input, shape index: {}]
  %s1 = inlined_call_operand.hbm [shape: bf16[128,128], index: 1, kind: input, shape index: {}]
  %s2 = inlined_call_operand.vmem [shape: f32[1,128], index: 2, kind: input, shape index: {}]
  %s3 = inlined_call_operand.hbm [shape: f32[128,128], index: 3, kind: input, shape index: {}]
  %s4 = inlined_call_operand.vmem [shape: f32[1,128], index: 4, kind: input, shape index: {}]
  %s5 = inlined_call_operand.hbm [shape: f32[2,1,128], index: 5, kind: output, shape index: {}]
  %s6 = sld [smem:[#allocation0]]
  $region65: #{tpu_custom_call.1} parent=0
    _
  %s8 = ssub.s32 1, %s6
  %s9 = scalar_select 0, %s8, %s6
  $region1: #{tpu_custom_call.1} parent=0
    #allocation2 [shape = 'u8[131072]{0}', space=vmem, size = 0x20000, scoped, tag = 'input window, operand 0']
    #allocation3 [shape = 's32[2]{0}', space=sflag, size = 0x8, scoped, tag = 'scoped memory for tpu_custom_call.1']
    #allocation4 [shape = 's32[2]{0}', space=sflag, size = 0x8, scoped, tag = 'scoped memory for tpu_custom_call.1']
    #allocation5 [shape = 'u8[32768]{0}', space=vmem, size = 0x8000, scoped, tag = 'input window, operand 1, single buffered']
    #allocation6 [shape = 's32[1]{0}', space=sflag, size = 0x4, scoped, tag = 'scoped memory for tpu_custom_call.1']
    #allocation7 [shape = 'u8[65536]{0}', space=vmem, size = 0x10000, scoped, tag = 'input window, operand 3, single buffered']
    #allocation8 [shape = 'u8[1024]{0}', space=vmem, size = 0x400, scoped, tag = 'output window, operand 0']
    %10 = vsyncpa [#allocation3], 0
    %s11 = scalar_lea.sflag [#allocation3], 1
    %12 = vsyncpa %s11, 0
    %13 = vsyncpa [#allocation6], 0
    %14 = vsyncpa [#allocation4], 0
    %s15 = scalar_lea.sflag [#allocation4], 1
    %16 = vsyncpa %s15, 0
    loop: start=0, step=1, limit=4
    $region2: #{tpu_custom_call.1} parent=1 // loop_pre_header
      _
    $region3: #{tpu_custom_call.1} parent=1 // loop_header
      %s18 = sphi 0, %s22
      %p19 = scmp.ge.s32.totalorder %s18, 4
      %s28 = sphi 0, %s30
      %s31 = sphi 0, %s28
      %s32 = sphi 0, %s31
      %s48 = sphi 0, %s32
      %s52 = sphi 0, %s52
      %s54 = sphi 0, %s52
      %s55 = sphi 0, %s54
      %s69 = sphi 0, %s55
      %s73 = sphi 0, %s73
      %s75 = sphi 0, %s73
      %s76 = sphi 0, %s75
      %s90 = sphi 0, %s76
      %s94 = sphi 0, %s94
      %s96 = sphi 0, %s94
      %s97 = sphi 0, %s96
      %s111 = sphi 0, %s97
      %s115 = sphi 0, %s115
      %s117 = sphi 0, %s115
      %s118 = sphi 0, %s117
      %s132 = sphi 0, %s118
      %s138 = sphi 0, %s140
      %s141 = sphi 0, %s138
      %s142 = sphi 0, %s141
      %s158 = sphi 0, %s142
    $region4: #{tpu_custom_call.1} parent=1 // loop_header_branch
      %21 = sbr.rel (%p19) target = $region8
    $region5: #{tpu_custom_call.1} parent=1 // loop_body
      %s23 = ssub.s32 %s18, 1
      %s24 = ssub.s32 %s18, 2
      %s25 = sadd.s32 %s18, 1
      %s26 = ssub.s32 %s18, %s25
      %p27 = scmp.eq.s32.totalorder %s26, 0
      %s29 = sadd.s32 %s28, 1
      %s30 = scalar_select %p27, %s28, %s29
      %p33 = pneg %p27
      %p34 = scmp.eq.s32.totalorder %s18, 1
      %p35 = por %p33, %p34
      %p36 = scmp.ne.s32.totalorder %s28, %s31
      %p37 = scmp.eq.s32.totalorder %s18, 0
      %p38 = por %p36, %p37
      %p39 = scmp.ne.s32.totalorder %s28, %s31
      %p40 = scmp.eq.s32.totalorder %s23, 1
      %p41 = por %p39, %p40
      %p42 = scmp.ne.s32.totalorder %s31, %s32
      %p43 = scmp.eq.s32.totalorder %s23, 0
      %p44 = por %p42, %p43
      %p45 = scmp.ne.s32.totalorder %s31, %s32
      %p46 = scmp.eq.s32.totalorder %s24, 1
      %p47 = por %p45, %p46
      %p49 = scmp.ne.s32.totalorder %s32, %s48
      %p50 = scmp.eq.s32.totalorder %s24, 0
      %p51 = por %p49, %p50
      %s53 = sadd.s32 %s52, 1
      %p56 = scmp.eq.s32.totalorder %s18, 1
      %p57 = scmp.ne.s32.totalorder %s52, %s54
      %p58 = scmp.eq.s32.totalorder %s18, 0
      %p59 = por %p57, %p58
      %p60 = scmp.ne.s32.totalorder %s52, %s54
      %p61 = scmp.eq.s32.totalorder %s23, 1
      %p62 = por %p60, %p61
      %p63 = scmp.ne.s32.totalorder %s54, %s55
      %p64 = scmp.eq.s32.totalorder %s23, 0
      %p65 = por %p63, %p64
      %p66 = scmp.ne.s32.totalorder %s54, %s55
      %p67 = scmp.eq.s32.totalorder %s24, 1
      %p68 = por %p66, %p67
      %p70 = scmp.ne.s32.totalorder %s55, %s69
      %p71 = scmp.eq.s32.totalorder %s24, 0
      %p72 = por %p70, %p71
      %s74 = sadd.s32 %s73, 1
      %p77 = scmp.eq.s32.totalorder %s18, 1
      %p78 = scmp.ne.s32.totalorder %s73, %s75
      %p79 = scmp.eq.s32.totalorder %s18, 0
      %p80 = por %p78, %p79
      %p81 = scmp.ne.s32.totalorder %s73, %s75
      %p82 = scmp.eq.s32.totalorder %s23, 1
      %p83 = por %p81, %p82
      %p84 = scmp.ne.s32.totalorder %s75, %s76
      %p85 = scmp.eq.s32.totalorder %s23, 0
      %p86 = por %p84, %p85
      %p87 = scmp.ne.s32.totalorder %s75, %s76
      %p88 = scmp.eq.s32.totalorder %s24, 1
      %p89 = por %p87, %p88
      %p91 = scmp.ne.s32.totalorder %s76, %s90
      %p92 = scmp.eq.s32.totalorder %s24, 0
      %p93 = por %p91, %p92
      %s95 = sadd.s32 %s94, 1
      %p98 = scmp.eq.s32.totalorder %s18, 1
      %p99 = scmp.ne.s32.totalorder %s94, %s96
      %p100 = scmp.eq.s32.totalorder %s18, 0
      %p101 = por %p99, %p100
      %p102 = scmp.ne.s32.totalorder %s94, %s96
      %p103 = scmp.eq.s32.totalorder %s23, 1
      %p104 = por %p102, %p103
      %p105 = scmp.ne.s32.totalorder %s96, %s97
      %p106 = scmp.eq.s32.totalorder %s23, 0
      %p107 = por %p105, %p106
      %p108 = scmp.ne.s32.totalorder %s96, %s97
      %p109 = scmp.eq.s32.totalorder %s24, 1
      %p110 = por %p108, %p109
      %p112 = scmp.ne.s32.totalorder %s97, %s111
      %p113 = scmp.eq.s32.totalorder %s24, 0
      %p114 = por %p112, %p113
      %s116 = sadd.s32 %s115, 1
      %p119 = scmp.eq.s32.totalorder %s18, 1
      %p120 = scmp.ne.s32.totalorder %s115, %s117
      %p121 = scmp.eq.s32.totalorder %s18, 0
      %p122 = por %p120, %p121
      %p123 = scmp.ne.s32.totalorder %s115, %s117
      %p124 = scmp.eq.s32.totalorder %s23, 1
      %p125 = por %p123, %p124
      %p126 = scmp.ne.s32.totalorder %s117, %s118
      %p127 = scmp.eq.s32.totalorder %s23, 0
      %p128 = por %p126, %p127
      %p129 = scmp.ne.s32.totalorder %s117, %s118
      %p130 = scmp.eq.s32.totalorder %s24, 1
      %p131 = por %p129, %p130
      %p133 = scmp.ne.s32.totalorder %s118, %s132
      %p134 = scmp.eq.s32.totalorder %s24, 0
      %p135 = por %p133, %p134
      %s136 = ssub.s32 %s18, %s25
      %p137 = scmp.eq.s32.totalorder %s136, 0
      %s139 = sadd.s32 %s138, 1
      %s140 = scalar_select %p137, %s138, %s139
      %p143 = pneg %p137
      %p144 = scmp.eq.s32.totalorder %s18, 1
      %p145 = por %p143, %p144
      %p146 = scmp.ne.s32.totalorder %s138, %s141
      %p147 = scmp.eq.s32.totalorder %s18, 0
      %p148 = por %p146, %p147
      %p149 = scmp.ne.s32.totalorder %s138, %s141
      %p150 = scmp.eq.s32.totalorder %s23, 1
      %p151 = por %p149, %p150
      %p152 = scmp.ne.s32.totalorder %s141, %s142
      %p153 = scmp.eq.s32.totalorder %s23, 0
      %p154 = por %p152, %p153
      %p155 = scmp.ne.s32.totalorder %s141, %s142
      %p156 = scmp.eq.s32.totalorder %s24, 1
      %p157 = por %p155, %p156
      %p159 = scmp.ne.s32.totalorder %s142, %s158
      %p160 = scmp.eq.s32.totalorder %s24, 0
      %p161 = por %p159, %p160
      %p162 = scmp.le.s32.totalorder 1, %s18
      %p163 = scmp.lt.s32.totalorder %s18, 3
      %p164 = pnand %p162, %p163
      %p165 = pneg %p164
      // Predicated region
      $region9: #{tpu_custom_call.1} parent=5 // pred_check
        _
      $region10: #{tpu_custom_call.1} parent=5 // pred_check_branch
        %167 = sbr.rel (%p164) target = $region12
      $region11: #{tpu_custom_call.1} parent=5 // pred_region
        %s168 = ssub.s32 %s18, 1
        // Predicated region
        $region13: #{tpu_custom_call.1} parent=11 // pred_check
          %p169 = pneg %p65
        $region14: #{tpu_custom_call.1} parent=11 // pred_check_branch
          %171 = sbr.rel (%p169) target = $region16
        $region15: #{tpu_custom_call.1} parent=11 // pred_region
          %s173 = ssub.s32 1024, 1024
          %174 = vsyncadd [#allocation6], %s173
          %s175 = sshll.u32 [#allocation5], 4
          %s176 = int_to_ptr.vmem [resolvable:$true] %s175
          %181 = dma.hbm_to_vmem [thread:$0]  %s1, 1024, %s176, [#allocation6], 64, 64, 4
        $region16: #{tpu_custom_call.1} parent=11 // pred_fallthru
          _
        // Predicated region
        $region17: #{tpu_custom_call.1} parent=11 // pred_check
          %p182 = pneg %p86
        $region18: #{tpu_custom_call.1} parent=11 // pred_check_branch
          %184 = sbr.rel (%p182) target = $region20
        $region19: #{tpu_custom_call.1} parent=11 // pred_region
          _
        $region20: #{tpu_custom_call.1} parent=11 // pred_fallthru
          _
        // Predicated region
        $region21: #{tpu_custom_call.1} parent=11 // pred_check
          %p185 = pneg %p107
        $region22: #{tpu_custom_call.1} parent=11 // pred_check_branch
          %187 = sbr.rel (%p185) target = $region24
        $region23: #{tpu_custom_call.1} parent=11 // pred_region
          %s189 = ssub.s32 2048, 2048
          %190 = vsyncadd [#allocation6], %s189
          %s191 = sshll.u32 [#allocation7], 4
          %s192 = int_to_ptr.vmem [resolvable:$true] %s191
          %197 = dma.hbm_to_vmem [thread:$0]  %s3, 2048, %s192, [#allocation6], 128, 128, 8
        $region24: #{tpu_custom_call.1} parent=11 // pred_fallthru
          _
        // Predicated region
        $region25: #{tpu_custom_call.1} parent=11 // pred_check
          %p198 = pneg %p128
        $region26: #{tpu_custom_call.1} parent=11 // pred_check_branch
          %200 = sbr.rel (%p198) target = $region28
        $region27: #{tpu_custom_call.1} parent=11 // pred_region
          _
        $region28: #{tpu_custom_call.1} parent=11 // pred_fallthru
          _
      $region12: #{tpu_custom_call.1} parent=5 // pred_fallthru
        _
      %p201 = scmp.lt.s32.totalorder %s18, 2
      // Predicated region
      $region29: #{tpu_custom_call.1} parent=5 // pred_check
        %p202 = pneg %p201
      $region30: #{tpu_custom_call.1} parent=5 // pred_check_branch
        %204 = sbr.rel (%p202) target = $region32
      $region31: #{tpu_custom_call.1} parent=5 // pred_region
        // Predicated region
        $region33: #{tpu_custom_call.1} parent=31 // pred_check
          %p205 = pneg %p38
        $region34: #{tpu_custom_call.1} parent=31 // pred_check_branch
          %207 = sbr.rel (%p205) target = $region36
        $region35: #{tpu_custom_call.1} parent=31 // pred_region
          %s208 = sand.u32 %s28, 1
          %s209 = scalar_lea.sflag [#allocation3], %s208
          %s210 = sand.u32 %s28, 1
          %s211 = smul.addr %s210, 128
          %s212 = scalar_lea.vmem [#allocation2], %s211
          %s214 = ssub.s32 2048, 2048
          %215 = vsyncadd %s209, %s214
          %s216 = smul.addr %s18, 32
          %s217 = smul.addr %s216, 64
          %s218 = scalar_lea.hbm %s0, %s217
          %s219 = sshll.u32 %s212, 4
          %s220 = int_to_ptr.vmem [resolvable:$true] %s219
          %225 = dma.hbm_to_vmem [thread:$0]  %s218, 2048, %s220, %s209, 64, 64, 4
        $region36: #{tpu_custom_call.1} parent=31 // pred_fallthru
          _
      $region32: #{tpu_custom_call.1} parent=5 // pred_fallthru
        _
      %p226 = scmp.le.s32.totalorder 1, %s18
      %p227 = scmp.lt.s32.totalorder %s18, 3
      %p228 = pnand %p226, %p227
      %p229 = pneg %p228
      // Predicated region
      $region37: #{tpu_custom_call.1} parent=5 // pred_check
        _
      $region38: #{tpu_custom_call.1} parent=5 // pred_check_branch
        %231 = sbr.rel (%p228) target = $region40
      $region39: #{tpu_custom_call.1} parent=5 // pred_region
        %s232 = ssub.s32 %s18, 1
        %s233 = sand.u32 %s31, 1
        %s234 = scalar_lea.sflag [#allocation3], %s233
        %s235 = sand.u32 %s31, 1
        %s236 = smul.addr %s235, 128
        %s237 = scalar_lea.vmem [#allocation2], %s236
        // Predicated region
        $region41: #{tpu_custom_call.1} parent=39 // pred_check
          %p238 = pneg %p44
        $region42: #{tpu_custom_call.1} parent=39 // pred_check_branch
          %240 = sbr.rel (%p238) target = $region44
        $region43: #{tpu_custom_call.1} parent=39 // pred_region
          %241 = dma.done %s234, 2048
        $region44: #{tpu_custom_call.1} parent=39 // pred_fallthru
          _
        // Predicated region
        $region45: #{tpu_custom_call.1} parent=39 // pred_check
          %p242 = pneg %p65
        $region46: #{tpu_custom_call.1} parent=39 // pred_check_branch
          %244 = sbr.rel (%p242) target = $region48
        $region47: #{tpu_custom_call.1} parent=39 // pred_region
          %245 = dma.done [#allocation6], 1024
        $region48: #{tpu_custom_call.1} parent=39 // pred_fallthru
          _
        // Predicated region
        $region49: #{tpu_custom_call.1} parent=39 // pred_check
          %p246 = pneg %p107
        $region50: #{tpu_custom_call.1} parent=39 // pred_check_branch
          %248 = sbr.rel (%p246) target = $region52
        $region51: #{tpu_custom_call.1} parent=39 // pred_region
          %249 = dma.done [#allocation6], 2048
        $region52: #{tpu_custom_call.1} parent=39 // pred_fallthru
          _
        %s250 = sand.u32 %s31, 1
        %s251 = scalar_lea.sflag [#allocation3], %s250
        %s252 = sand.u32 %s31, 1
        %s253 = smul.addr %s252, 128
        %s254 = scalar_lea.vmem [#allocation2], %s253
        %p255 = pneg %p44
        %p256 = pneg %p41
        %p257 = pneg %p65
        %p258 = pneg %p62
        %p259 = pneg %p86
        %p260 = pneg %p83
        %p261 = pneg %p107
        %p262 = pneg %p104
        %p263 = pneg %p128
        %p264 = pneg %p125
        %p265 = pneg %p154
        %p266 = pneg %p151
        %s267 = sand.u32 %s141, 1
        %s268 = scalar_lea.sflag [#allocation4], %s267
        %s269 = sand.u32 %s141, 1
        %s270 = scalar_lea.vmem [#allocation8], %s269
        %v272 = vld [vmem:[%s237] sm:$0xf]
        %v273 = vld [vmem:[%s237 + $0x4] sm:$0xf]
        %v274 = vld [vmem:[%s237 + $0x8] sm:$0xf]
        %v275 = vld [vmem:[%s237 + $0xc] sm:$0xf]
        %v276 = vld [vmem:[%s237 + $0x10] sm:$0xf]
        %v277 = vld [vmem:[%s237 + $0x14] sm:$0xf]
        %v278 = vld [vmem:[%s237 + $0x18] sm:$0xf]
        %v279 = vld [vmem:[%s237 + $0x1c] sm:$0xf]
        %v280 = vld [vmem:[%s237 + $0x20] sm:$0xf]
        %v281 = vld [vmem:[%s237 + $0x24] sm:$0xf]
        %v282 = vld [vmem:[%s237 + $0x28] sm:$0xf]
        %v283 = vld [vmem:[%s237 + $0x2c] sm:$0xf]
        %v284 = vld [vmem:[%s237 + $0x30] sm:$0xf]
        %v285 = vld [vmem:[%s237 + $0x34] sm:$0xf]
        %v286 = vld [vmem:[%s237 + $0x38] sm:$0xf]
        %v287 = vld [vmem:[%s237 + $0x3c] sm:$0xf]
        %v288 = vld [vmem:[%s237 + $0x40] sm:$0xf]
        %v289 = vld [vmem:[%s237 + $0x44] sm:$0xf]
        %v290 = vld [vmem:[%s237 + $0x48] sm:$0xf]
        %v291 = vld [vmem:[%s237 + $0x4c] sm:$0xf]
        %v292 = vld [vmem:[%s237 + $0x50] sm:$0xf]
        %v293 = vld [vmem:[%s237 + $0x54] sm:$0xf]
        %v294 = vld [vmem:[%s237 + $0x58] sm:$0xf]
        %v295 = vld [vmem:[%s237 + $0x5c] sm:$0xf]
        %v296 = vld [vmem:[%s237 + $0x60] sm:$0xf]
        %v297 = vld [vmem:[%s237 + $0x64] sm:$0xf]
        %v298 = vld [vmem:[%s237 + $0x68] sm:$0xf]
        %v299 = vld [vmem:[%s237 + $0x6c] sm:$0xf]
        %v300 = vld [vmem:[%s237 + $0x70] sm:$0xf]
        %v301 = vld [vmem:[%s237 + $0x74] sm:$0xf]
        %v302 = vld [vmem:[%s237 + $0x78] sm:$0xf]
        %v303 = vld [vmem:[%s237 + $0x7c] sm:$0xf]
        %v304 = vld [vmem:[#allocation5] sm:$0xf]
        %v305 = vld [vmem:[#allocation5 + $0x4] sm:$0xf]
        %v306 = vld [vmem:[#allocation5 + $0x8] sm:$0xf]
        %v307 = vld [vmem:[#allocation5 + $0xc] sm:$0xf]
        %v308 = vld [vmem:[#allocation5 + $0x10] sm:$0xf]
        %v309 = vld [vmem:[#allocation5 + $0x14] sm:$0xf]
        %v310 = vld [vmem:[#allocation5 + $0x18] sm:$0xf]
        %v311 = vld [vmem:[#allocation5 + $0x1c] sm:$0xf]
        %v312 = vld [vmem:[#allocation5 + $0x20] sm:$0xf]
        %v313 = vld [vmem:[#allocation5 + $0x24] sm:$0xf]
        %v314 = vld [vmem:[#allocation5 + $0x28] sm:$0xf]
        %v315 = vld [vmem:[#allocation5 + $0x2c] sm:$0xf]
        %v316 = vld [vmem:[#allocation5 + $0x30] sm:$0xf]
        %v317 = vld [vmem:[#allocation5 + $0x34] sm:$0xf]
        %v318 = vld [vmem:[#allocation5 + $0x38] sm:$0xf]
        %v319 = vld [vmem:[#allocation5 + $0x3c] sm:$0xf]
        %v320 = vld [vmem:[%s2] sm:$0x1]
        %v322 = vlaneseq
        %v323 = vshrl.u32 %v322, 7
        %v324 = vsub.s32 0, %v323
        %v325 = vrot.slane %v320, %v324
        %v359 = vunpack.c.l.b16 %v272
        %v360 = vunpack.c.l.b16 %v273
        %v361 = vunpack.c.l.b16 %v274
        %v362 = vunpack.c.l.b16 %v275
        %v363 = vunpack.c.l.b16 %v276
        %v364 = vunpack.c.l.b16 %v277
        %v365 = vunpack.c.l.b16 %v278
        %v366 = vunpack.c.l.b16 %v279
        %v367 = vunpack.c.l.b16 %v280
        %v368 = vunpack.c.l.b16 %v281
        %v369 = vunpack.c.l.b16 %v282
        %v370 = vunpack.c.l.b16 %v283
        %v371 = vunpack.c.l.b16 %v284
        %v372 = vunpack.c.l.b16 %v285
        %v373 = vunpack.c.l.b16 %v286
        %v374 = vunpack.c.l.b16 %v287
        %v375 = vunpack.c.l.b16 %v288
        %v376 = vunpack.c.l.b16 %v289
        %v377 = vunpack.c.l.b16 %v290
        %v378 = vunpack.c.l.b16 %v291
        %v379 = vunpack.c.l.b16 %v292
        %v380 = vunpack.c.l.b16 %v293
        %v381 = vunpack.c.l.b16 %v294
        %v382 = vunpack.c.l.b16 %v295
        %v383 = vunpack.c.l.b16 %v296
        %v384 = vunpack.c.l.b16 %v297
        %v385 = vunpack.c.l.b16 %v298
        %v386 = vunpack.c.l.b16 %v299
        %v387 = vunpack.c.l.b16 %v300
        %v388 = vunpack.c.l.b16 %v301
        %v389 = vunpack.c.l.b16 %v302
        %v390 = vunpack.c.l.b16 %v303
        %v391 = vpack.c.b16 %v360, %v359
        %v392 = vpack.c.b16 %v362, %v361
        %v393 = vpack.c.b16 %v364, %v363
        %v394 = vpack.c.b16 %v366, %v365
        %v395 = vpack.c.b16 %v368, %v367
        %v396 = vpack.c.b16 %v370, %v369
        %v397 = vpack.c.b16 %v372, %v371
        %v398 = vpack.c.b16 %v374, %v373
        %v399 = vpack.c.b16 %v376, %v375
        %v400 = vpack.c.b16 %v378, %v377
        %v401 = vpack.c.b16 %v380, %v379
        %v402 = vpack.c.b16 %v382, %v381
        %v403 = vpack.c.b16 %v384, %v383
        %v404 = vpack.c.b16 %v386, %v385
        %v405 = vpack.c.b16 %v388, %v387
        %v406 = vpack.c.b16 %v390, %v389
        %v439 = vunpack.c.l.b16 %v304
        %v440 = vunpack.c.l.b16 %v305
        %v441 = vunpack.c.l.b16 %v306
        %v442 = vunpack.c.l.b16 %v307
        %v443 = vunpack.c.l.b16 %v308
        %v444 = vunpack.c.l.b16 %v309
        %v445 = vunpack.c.l.b16 %v310
        %v446 = vunpack.c.l.b16 %v311
        %v447 = vunpack.c.l.b16 %v312
        %v448 = vunpack.c.l.b16 %v313
        %v449 = vunpack.c.l.b16 %v314
        %v450 = vunpack.c.l.b16 %v315
        %v451 = vunpack.c.l.b16 %v316
        %v452 = vunpack.c.l.b16 %v317
        %v453 = vunpack.c.l.b16 %v318
        %v454 = vunpack.c.l.b16 %v319
        %v455 = vpack.c.b16 %v440, %v439
        %v456 = vpack.c.b16 %v442, %v441
        %v457 = vpack.c.b16 %v444, %v443
        %v458 = vpack.c.b16 %v446, %v445
        %v459 = vpack.c.b16 %v448, %v447
        %v460 = vpack.c.b16 %v450, %v449
        %v461 = vpack.c.b16 %v452, %v451
        %v462 = vpack.c.b16 %v454, %v453
        %471 = vmatprep.subr.bf16.mxu0 0
        %472 = vmatpush1.bf16.msra.mxu0 %v455
        %473 = vmatprep.subr.bf16.mxu0 0
        %474 = vmatpush1.bf16.msra.mxu0 %v456
        %475 = vmatprep.subr.bf16.mxu0 0
        %476 = vmatpush1.bf16.msra.mxu0 %v457
        %477 = vmatprep.subr.bf16.mxu0 0
        %478 = vmatpush1.bf16.msra.mxu0 %v458
        %479 = vmatprep.subr.bf16.mxu0 0
        %480 = vmatpush1.bf16.msra.mxu0 %v459
        %481 = vmatprep.subr.bf16.mxu0 0
        %482 = vmatpush1.bf16.msra.mxu0 %v460
        %483 = vmatprep.subr.bf16.mxu0 0
        %484 = vmatpush1.bf16.msra.mxu0 %v461
        %485 = vmatprep.subr.bf16.mxu0 0
        %486 = vmatpush1.bf16.msra.mxu0 %v462
        %487 = vmatprep.subr.bf16.mxu0 0
        %488 = vmatpush1.bf16.msra.mxu0 0
        %489 = vmatprep.subr.bf16.mxu0 0
        %490 = vmatpush1.bf16.msra.mxu0 0
        %491 = vmatprep.subr.bf16.mxu0 0
        %492 = vmatpush1.bf16.msra.mxu0 0
        %493 = vmatprep.subr.bf16.mxu0 0
        %494 = vmatpush1.bf16.msra.mxu0 0
        %495 = vmatprep.subr.bf16.mxu0 0
        %496 = vmatpush1.bf16.msra.mxu0 0
        %497 = vmatprep.subr.bf16.mxu0 0
        %498 = vmatpush1.bf16.msra.mxu0 0
        %499 = vmatprep.subr.bf16.mxu0 0
        %500 = vmatpush1.bf16.msra.mxu0 0
        %501 = vmatprep.subr.bf16.mxu0 0
        %502 = vmatpush1.bf16.msra.mxu0 0
        %503 = vmatprep.mubr.bf16.mxu0 0
        %504 = vmatmul.mubr.bf16.gmra.mrb[0].mxu0 %v391
        %v505 = vpop.f32.mrb[0].mxu0
        %v506 = vadd.f32 %v325, %v505
        %v507 = vpop.f32.mrb[0].mxu0
        %v508 = vpop.f32.mrb[0].mxu0
        %v509 = vadd.f32 %v325, %v508
        %v510 = vpop.f32.mrb[0].mxu0
        %511 = vmatprep.mubr.bf16.mxu0 0
        %512 = vmatmul.mubr.bf16.gmra.mrb[0].mxu0 %v392
        %v513 = vpop.f32.mrb[0].mxu0
        %v514 = vadd.f32 %v325, %v513
        %v515 = vpop.f32.mrb[0].mxu0
        %v516 = vpop.f32.mrb[0].mxu0
        %v517 = vadd.f32 %v325, %v516
        %v518 = vpop.f32.mrb[0].mxu0
        %519 = vmatprep.mubr.bf16.mxu0 0
        %520 = vmatmul.mubr.bf16.gmra.mrb[0].mxu0 %v393
        %v521 = vpop.f32.mrb[0].mxu0
        %v522 = vadd.f32 %v325, %v521
        %v523 = vpop.f32.mrb[0].mxu0
        %v524 = vpop.f32.mrb[0].mxu0
        %v525 = vadd.f32 %v325, %v524
        %v526 = vpop.f32.mrb[0].mxu0
        %527 = vmatprep.mubr.bf16.mxu0 0
        %528 = vmatmul.mubr.bf16.gmra.mrb[0].mxu0 %v394
        %v529 = vpop.f32.mrb[0].mxu0
        %v530 = vadd.f32 %v325, %v529
        %v531 = vpop.f32.mrb[0].mxu0
        %v532 = vpop.f32.mrb[0].mxu0
        %v533 = vadd.f32 %v325, %v532
        %v534 = vpop.f32.mrb[0].mxu0
        %535 = vmatprep.mubr.bf16.mxu0 0
        %536 = vmatmul.mubr.bf16.gmra.mrb[0].mxu0 %v395
        %v537 = vpop.f32.mrb[0].mxu0
        %v538 = vadd.f32 %v325, %v537
        %v539 = vpop.f32.mrb[0].mxu0
        %v540 = vpop.f32.mrb[0].mxu0
        %v541 = vadd.f32 %v325, %v540
        %v542 = vpop.f32.mrb[0].mxu0
        %543 = vmatprep.mubr.bf16.mxu0 0
        %544 = vmatmul.mubr.bf16.gmra.mrb[0].mxu0 %v396
        %v545 = vpop.f32.mrb[0].mxu0
        %v546 = vadd.f32 %v325, %v545
        %v547 = vpop.f32.mrb[0].mxu0
        %v548 = vpop.f32.mrb[0].mxu0
        %v549 = vadd.f32 %v325, %v548
        %v550 = vpop.f32.mrb[0].mxu0
        %551 = vmatprep.mubr.bf16.mxu0 0
        %552 = vmatmul.mubr.bf16.gmra.mrb[0].mxu0 %v397
        %v553 = vpop.f32.mrb[0].mxu0
        %v554 = vadd.f32 %v325, %v553
        %v555 = vpop.f32.mrb[0].mxu0
        %v556 = vpop.f32.mrb[0].mxu0
        %v557 = vadd.f32 %v325, %v556
        %v558 = vpop.f32.mrb[0].mxu0
        %559 = vmatprep.mubr.bf16.mxu0 0
        %560 = vmatmul.mubr.bf16.gmra.mrb[0].mxu0 %v398
        %v561 = vpop.f32.mrb[0].mxu0
        %v562 = vadd.f32 %v325, %v561
        %v563 = vpop.f32.mrb[0].mxu0
        %v564 = vpop.f32.mrb[0].mxu0
        %v565 = vadd.f32 %v325, %v564
        %v566 = vpop.f32.mrb[0].mxu0
        %567 = vmatprep.mubr.bf16.mxu0 0
        %568 = vmatmul.mubr.bf16.gmra.mrb[0].mxu0 %v399
        %v569 = vpop.f32.mrb[0].mxu0
        %v570 = vadd.f32 %v325, %v569
        %v571 = vpop.f32.mrb[0].mxu0
        %v572 = vpop.f32.mrb[0].mxu0
        %v573 = vadd.f32 %v325, %v572
        %v574 = vpop.f32.mrb[0].mxu0
        %575 = vmatprep.mubr.bf16.mxu0 0
        %576 = vmatmul.mubr.bf16.gmra.mrb[0].mxu0 %v400
        %v577 = vpop.f32.mrb[0].mxu0
        %v578 = vadd.f32 %v325, %v577
        %v579 = vpop.f32.mrb[0].mxu0
        %v580 = vpop.f32.mrb[0].mxu0
        %v581 = vadd.f32 %v325, %v580
        %v582 = vpop.f32.mrb[0].mxu0
        %583 = vmatprep.mubr.bf16.mxu0 0
        %584 = vmatmul.mubr.bf16.gmra.mrb[0].mxu0 %v401
        %v585 = vpop.f32.mrb[0].mxu0
        %v586 = vadd.f32 %v325, %v585
        %v587 = vpop.f32.mrb[0].mxu0
        %v588 = vpop.f32.mrb[0].mxu0
        %v589 = vadd.f32 %v325, %v588
        %v590 = vpop.f32.mrb[0].mxu0
        %591 = vmatprep.mubr.bf16.mxu0 0
        %592 = vmatmul.mubr.bf16.gmra.mrb[0].mxu0 %v402
        %v593 = vpop.f32.mrb[0].mxu0
        %v594 = vadd.f32 %v325, %v593
        %v595 = vpop.f32.mrb[0].mxu0
        %v596 = vpop.f32.mrb[0].mxu0
        %v597 = vadd.f32 %v325, %v596
        %v598 = vpop.f32.mrb[0].mxu0
        %599 = vmatprep.mubr.bf16.mxu0 0
        %600 = vmatmul.mubr.bf16.gmra.mrb[0].mxu0 %v403
        %v601 = vpop.f32.mrb[0].mxu0
        %v602 = vadd.f32 %v325, %v601
        %v603 = vpop.f32.mrb[0].mxu0
        %v604 = vpop.f32.mrb[0].mxu0
        %v605 = vadd.f32 %v325, %v604
        %v606 = vpop.f32.mrb[0].mxu0
        %607 = vmatprep.mubr.bf16.mxu0 0
        %608 = vmatmul.mubr.bf16.gmra.mrb[0].mxu0 %v404
        %v609 = vpop.f32.mrb[0].mxu0
        %v610 = vadd.f32 %v325, %v609
        %v611 = vpop.f32.mrb[0].mxu0
        %v612 = vpop.f32.mrb[0].mxu0
        %v613 = vadd.f32 %v325, %v612
        %v614 = vpop.f32.mrb[0].mxu0
        %615 = vmatprep.mubr.bf16.mxu0 0
        %616 = vmatmul.mubr.bf16.gmra.mrb[0].mxu0 %v405
        %v617 = vpop.f32.mrb[0].mxu0
        %v618 = vadd.f32 %v325, %v617
        %v619 = vpop.f32.mrb[0].mxu0
        %v620 = vpop.f32.mrb[0].mxu0
        %v621 = vadd.f32 %v325, %v620
        %v622 = vpop.f32.mrb[0].mxu0
        %623 = vmatprep.mubr.bf16.mxu0 0
        %624 = vmatmul.mubr.bf16.gmra.mrb[0].mxu0 %v406
        %v625 = vpop.f32.mrb[0].mxu0
        %v626 = vadd.f32 %v325, %v625
        %v627 = vpop.f32.mrb[0].mxu0
        %v628 = vpop.f32.mrb[0].mxu0
        %v629 = vadd.f32 %v325, %v628
        %v630 = vpop.f32.mrb[0].mxu0
        %631 = vdwg.mxu0
        %v632 = vmax.f32 %v506, 0.0
        %v633 = vmax.f32 %v509, 0.0
        %v634 = vmax.f32 %v514, 0.0
        %v635 = vmax.f32 %v517, 0.0
        %v636 = vmax.f32 %v522, 0.0
        %v637 = vmax.f32 %v525, 0.0
        %v638 = vmax.f32 %v530, 0.0
        %v639 = vmax.f32 %v533, 0.0
        %v640 = vmax.f32 %v538, 0.0
        %v641 = vmax.f32 %v541, 0.0
        %v642 = vmax.f32 %v546, 0.0
        %v643 = vmax.f32 %v549, 0.0
        %v644 = vmax.f32 %v554, 0.0
        %v645 = vmax.f32 %v557, 0.0
        %v646 = vmax.f32 %v562, 0.0
        %v647 = vmax.f32 %v565, 0.0
        %v648 = vmax.f32 %v570, 0.0
        %v649 = vmax.f32 %v573, 0.0
        %v650 = vmax.f32 %v578, 0.0
        %v651 = vmax.f32 %v581, 0.0
        %v652 = vmax.f32 %v586, 0.0
        %v653 = vmax.f32 %v589, 0.0
        %v654 = vmax.f32 %v594, 0.0
        %v655 = vmax.f32 %v597, 0.0
        %v656 = vmax.f32 %v602, 0.0
        %v657 = vmax.f32 %v605, 0.0
        %v658 = vmax.f32 %v610, 0.0
        %v659 = vmax.f32 %v613, 0.0
        %v660 = vmax.f32 %v618, 0.0
        %v661 = vmax.f32 %v621, 0.0
        %v662 = vmax.f32 %v626, 0.0
        %v663 = vmax.f32 %v629, 0.0
        %v664 = vadd.f32 %v632, %v633
        %v665 = vadd.f32 %v664, %v634
        %v666 = vadd.f32 %v665, %v635
        %v667 = vadd.f32 %v666, %v636
        %v668 = vadd.f32 %v667, %v637
        %v669 = vadd.f32 %v668, %v638
        %v670 = vadd.f32 %v669, %v639
        %v671 = vadd.f32 %v670, %v640
        %v672 = vadd.f32 %v671, %v641
        %v673 = vadd.f32 %v672, %v642
        %v674 = vadd.f32 %v673, %v643
        %v675 = vadd.f32 %v674, %v644
        %v676 = vadd.f32 %v675, %v645
        %v677 = vadd.f32 %v676, %v646
        %v678 = vadd.f32 %v677, %v647
        %v679 = vadd.f32 %v678, %v648
        %v680 = vadd.f32 %v679, %v649
        %v681 = vadd.f32 %v680, %v650
        %v682 = vadd.f32 %v681, %v651
        %v683 = vadd.f32 %v682, %v652
        %v684 = vadd.f32 %v683, %v653
        %v685 = vadd.f32 %v684, %v654
        %v686 = vadd.f32 %v685, %v655
        %v687 = vadd.f32 %v686, %v656
        %v688 = vadd.f32 %v687, %v657
        %v689 = vadd.f32 %v688, %v658
        %v690 = vadd.f32 %v689, %v659
        %v691 = vadd.f32 %v690, %v660
        %v692 = vadd.f32 %v691, %v661
        %v693 = vadd.f32 %v692, %v662
        %v694 = vadd.f32 %v693, %v663
        %v695 = vrot.slane %v694, 4
        %v696 = vadd.f32 %v694, %v695
        %v697 = vrot.slane %v696, 2
        %v698 = vadd.f32 %v696, %v697
        %v699 = vrot.slane %v698, 1
        %v700 = vadd.f32 %v698, %v699
        %v701 = vmul.f32 %v700, 0.00390625
        %v702 = vld [vmem:[#allocation7] sm:$0xff]
        %v703 = vld [vmem:[#allocation7 + $0x8] sm:$0xff]
        %v704 = vld [vmem:[#allocation7 + $0x10] sm:$0xff]
        %v705 = vld [vmem:[#allocation7 + $0x18] sm:$0xff]
        %v706 = vld [vmem:[#allocation7 + $0x20] sm:$0xff]
        %v707 = vld [vmem:[#allocation7 + $0x28] sm:$0xff]
        %v708 = vld [vmem:[#allocation7 + $0x30] sm:$0xff]
        %v709 = vld [vmem:[#allocation7 + $0x38] sm:$0xff]
        %v710 = vld [vmem:[#allocation7 + $0x40] sm:$0xff]
        %v711 = vld [vmem:[#allocation7 + $0x48] sm:$0xff]
        %v712 = vld [vmem:[#allocation7 + $0x50] sm:$0xff]
        %v713 = vld [vmem:[#allocation7 + $0x58] sm:$0xff]
        %v714 = vld [vmem:[#allocation7 + $0x60] sm:$0xff]
        %v715 = vld [vmem:[#allocation7 + $0x68] sm:$0xff]
        %v716 = vld [vmem:[#allocation7 + $0x70] sm:$0xff]
        %v717 = vld [vmem:[#allocation7 + $0x78] sm:$0xff]
        %v718 = vld [vmem:[%s4] sm:$0x1]
        %719 = vmatprep.subr.mxu0 0.0
        %720 = vmatpush1.msra.mxu0 %v702
        %721 = vmatprep.subr.mxu0 0.0
        %722 = vmatpush1.msra.mxu0 %v703
        %723 = vmatprep.subr.mxu0 0.0
        %724 = vmatpush1.msra.mxu0 %v704
        %725 = vmatprep.subr.mxu0 0.0
        %726 = vmatpush1.msra.mxu0 %v705
        %727 = vmatprep.subr.mxu0 0.0
        %728 = vmatpush1.msra.mxu0 %v706
        %729 = vmatprep.subr.mxu0 0.0
        %730 = vmatpush1.msra.mxu0 %v707
        %731 = vmatprep.subr.mxu0 0.0
        %732 = vmatpush1.msra.mxu0 %v708
        %733 = vmatprep.subr.mxu0 0.0
        %734 = vmatpush1.msra.mxu0 %v709
        %735 = vmatprep.subr.mxu0 0.0
        %736 = vmatpush1.msra.mxu0 %v710
        %737 = vmatprep.subr.mxu0 0.0
        %738 = vmatpush1.msra.mxu0 %v711
        %739 = vmatprep.subr.mxu0 0.0
        %740 = vmatpush1.msra.mxu0 %v712
        %741 = vmatprep.subr.mxu0 0.0
        %742 = vmatpush1.msra.mxu0 %v713
        %743 = vmatprep.subr.mxu0 0.0
        %744 = vmatpush1.msra.mxu0 %v714
        %745 = vmatprep.subr.mxu0 0.0
        %746 = vmatpush1.msra.mxu0 %v715
        %747 = vmatprep.subr.mxu0 0.0
        %748 = vmatpush1.msra.mxu0 %v716
        %749 = vmatprep.subr.mxu0 0.0
        %750 = vmatpush1.msra.mxu0 %v717
        %751 = vmatprep.subr.mxu0 0.0
        %752 = vmatpush1.msra.mxu0 0.0
        %753 = vmatprep.subr.mxu0 0.0
        %754 = vmatpush1.msra.mxu0 0.0
        %755 = vmatprep.subr.mxu0 0.0
        %756 = vmatpush1.msra.mxu0 0.0
        %757 = vmatprep.subr.mxu0 0.0
        %758 = vmatpush1.msra.mxu0 0.0
        %759 = vmatprep.subr.mxu0 0.0
        %760 = vmatpush1.msra.mxu0 0.0
        %761 = vmatprep.subr.mxu0 0.0
        %762 = vmatpush1.msra.mxu0 0.0
        %763 = vmatprep.subr.mxu0 0.0
        %764 = vmatpush1.msra.mxu0 0.0
        %765 = vmatprep.subr.mxu0 0.0
        %766 = vmatpush1.msra.mxu0 0.0
        %767 = vmatprep.subr.mxu0 0.0
        %768 = vmatpush1.msra.mxu0 0.0
        %769 = vmatprep.subr.mxu0 0.0
        %770 = vmatpush1.msra.mxu0 0.0
        %771 = vmatprep.subr.mxu0 0.0
        %772 = vmatpush1.msra.mxu0 0.0
        %773 = vmatprep.subr.mxu0 0.0
        %774 = vmatpush1.msra.mxu0 0.0
        %775 = vmatprep.subr.mxu0 0.0
        %776 = vmatpush1.msra.mxu0 0.0
        %777 = vmatprep.subr.mxu0 0.0
        %778 = vmatpush1.msra.mxu0 0.0
        %779 = vmatprep.subr.mxu0 0.0
        %780 = vmatpush1.msra.mxu0 0.0
        %781 = vmatprep.subr.mxu0 0.0
        %782 = vmatpush1.msra.mxu0 0.0
        %783 = vmatprep.mubr.f32.mxu0 0.0
        %784 = vmatmul.mubr.f32.gmra.mrb[0].mxu0 %v701
        %v785 = vpop.f32.mrb[0].mxu0
        %v786 = vadd.f32 %v718, %v785
        %v787 = vpop.f32.mrb[0].mxu0
        %788 = vdwg.mxu0
        %v789 = vxor.u32 %v786, 2147483648
        %v790 = vmul.f32 %v789, 1.442695
        %v791 = vpow.pop %v790
        %v792 = vadd.f32 %v791, 1.0
        %v793 = vrcp.pop %v792
        %v794 = vmul.f32 1.0, %v793
        %795 = vst [vmem:[%s270] sm:$0x1] %v794
        %s796 = sand.u32 %s141, 1
        %s797 = scalar_lea.sflag [#allocation4], %s796
        %s798 = sand.u32 %s141, 1
        %s799 = scalar_lea.vmem [#allocation8], %s798
        // Predicated region
        $region53: #{tpu_custom_call.1} parent=39 // pred_check
          %p800 = pneg %p151
        $region54: #{tpu_custom_call.1} parent=39 // pred_check_branch
          %802 = sbr.rel (%p800) target = $region56
        $region55: #{tpu_custom_call.1} parent=39 // pred_region
          %s804 = ssub.s32 16, 16
          %805 = vsyncadd %s797, %s804
          %s806 = smul.addr %s23, 16
          %s807 = scalar_lea.hbm %s5, %s806
          %s809 = sshll.u32 %s799, 4
          %s810 = int_to_ptr.vmem [resolvable:$true] %s809
          %812 = dma.vmem_to_hbm [thread:$0]  %s810, 16, %s807, %s797
        $region56: #{tpu_custom_call.1} parent=39 // pred_fallthru
          _
      $region40: #{tpu_custom_call.1} parent=5 // pred_fallthru
        _
      %p813 = scmp.le.s32.totalorder 2, %s18
      // Predicated region
      $region57: #{tpu_custom_call.1} parent=5 // pred_check
        %p814 = pneg %p813
      $region58: #{tpu_custom_call.1} parent=5 // pred_check_branch
        %816 = sbr.rel (%p814) target = $region60
      $region59: #{tpu_custom_call.1} parent=5 // pred_region
        %s817 = ssub.s32 %s18, 2
        // Predicated region
        $region61: #{tpu_custom_call.1} parent=59 // pred_check
          %p818 = pneg %p157
        $region62: #{tpu_custom_call.1} parent=59 // pred_check_branch
          %820 = sbr.rel (%p818) target = $region64
        $region63: #{tpu_custom_call.1} parent=59 // pred_region
          %s821 = sand.u32 %s142, 1
          %s822 = scalar_lea.sflag [#allocation4], %s821
          %s823 = sand.u32 %s142, 1
          %s824 = scalar_lea.vmem [#allocation8], %s823
          %825 = dma.done %s822, 16
        $region64: #{tpu_custom_call.1} parent=59 // pred_fallthru
          _
      $region60: #{tpu_custom_call.1} parent=5 // pred_fallthru
        _
    $region6: #{tpu_custom_call.1} parent=1 // loop_footer
      %s22 = sadd.s32 1, %s18
    $region7: #{tpu_custom_call.1} parent=1 // loop_footer_branch
      %17 = sbr.rel target = $region3
    $region8: #{tpu_custom_call.1} parent=1 // loop_exit
      _
    %826 = vsyncpa [#allocation3], 1
    %s827 = scalar_lea.sflag [#allocation3], 1
    %828 = vsyncpa %s827, 1
    %829 = vsyncpa [#allocation6], 1
    %830 = vsyncpa [#allocation4], 1
    %s831 = scalar_lea.sflag [#allocation4], 1
    %832 = vsyncpa %s831, 1

</llo_original>
